<compile_context>
chip_gen: v5e
topology: v5e:2x2
jax: 0.10.0
libtpu: 0.0.40
codegen_flags: <defaults>
</compile_context>

<pallas_src>
import functools

import jax
import jax.numpy as jnp
from jax.experimental import pallas as pl
from jax.experimental.pallas import tpu as pltpu

HIDDEN = 128
LANE_MULTIPLE = 128  # lane-dense output width multiple
MAX_TB = 8192        # upper bound on rows per grid step


def _round_up(n, m):
    return ((n + m - 1) // m) * m


# -----------------------------------------------------------------------------
# Kernel
# -----------------------------------------------------------------------------
def qnetwork_kernel(x_ref, w1_ref, b1_ref, w2_ref, b2_ref, w3_ref, b3_ref,
                    out_ref):
    """Fused 3-layer MLP forward for one (TB, state) batch tile.

    x arrives f32 and is cast to bf16 in-kernel; weights are bf16 (MXU-native),
    biases f32.  Matmuls accumulate in f32, bias add + ReLU stay in f32
    (v5e-safe: no bf16 VPU there), and a single cast writes the bf16
    lane-dense output block.
    """
    x = x_ref[...].astype(jnp.bfloat16)                          # (TB, S)

    # Layer 1: Linear(state_size, 128) + ReLU.  K is tiny (MXU-starved) but
    # the kernel is memory/overhead-bound, so this is irrelevant.
    h1 = jnp.dot(x, w1_ref[...], preferred_element_type=jnp.float32)
    h1 = jnp.maximum(h1 + b1_ref[...], 0.0)                      # f32

    # Layer 2: Linear(128, 128) + ReLU
    h2 = jnp.dot(h1.astype(jnp.bfloat16), w2_ref[...],
                 preferred_element_type=jnp.float32)
    h2 = jnp.maximum(h2 + b2_ref[...], 0.0)                      # f32

    # Layer 3: Linear(128, action_padded), no activation, lane-dense store.
    out = jnp.dot(h2.astype(jnp.bfloat16), w3_ref[...],
                  preferred_element_type=jnp.float32)
    out_ref[...] = (out + b3_ref[...]).astype(out_ref.dtype)     # bf16 store


# -----------------------------------------------------------------------------
# One-time parameter preparation (keep OUT of the per-forward path)
# -----------------------------------------------------------------------------
def prepare_params(params):
    """bf16 weight casts, lane-padding of the output layer (to a multiple of
    128 lanes for unmasked vst), f32 (1, N) biases.  Call once and reuse."""
    A = params["w3"].shape[1]
    lane = _round_up(A, LANE_MULTIPLE)
    w3 = jnp.zeros((HIDDEN, lane), jnp.bfloat16).at[:, :A].set(
        params["w3"].astype(jnp.bfloat16))
    b3 = jnp.zeros((1, lane), jnp.float32).at[:, :A].set(
        params["b3"].reshape(1, A).astype(jnp.float32))
    return {
        "w1": params["w1"].astype(jnp.bfloat16),                 # (S, 128)
        "b1": params["b1"].reshape(1, HIDDEN).astype(jnp.float32),
        "w2": params["w2"].astype(jnp.bfloat16),                 # (128, 128)
        "b2": params["b2"].reshape(1, HIDDEN).astype(jnp.float32),
        "w3": w3,                                                # (128, lane)
        "b3": b3,                                                # (1, lane)
    }


# -----------------------------------------------------------------------------
# Tile-size selection (trace-time, pure Python)
# -----------------------------------------------------------------------------
def _tile_rows(B, S, lane):
    """Largest batch tile that (a) caps at MAX_TB, (b) keeps the
    double-buffered x (f32) + out (bf16) tiles inside a ~12 MiB budget (safe
    under v5e's 16 MiB scoped-VMEM default; v6e/v7x have 32 MiB), and
    (c) leaves >= 2 grid steps on v7x so both TensorCores get work."""
    kind = ""
    try:
        kind = jax.devices()[0].device_kind.lower()
    except Exception:
        pass
    num_tc = 2 if "v7" in kind else 1

    per_row_bytes = 2 * (S * 4 + lane * 2)        # 2x x-tile f32 + 2x out bf16
    vmem_budget = 12 * 1024 * 1024
    mem_cap = max(8, (vmem_budget // per_row_bytes) // 8 * 8)

    b_sub = _round_up(B, 8)
    tb = min(MAX_TB, mem_cap, b_sub)
    if num_tc > 1 and b_sub >= 16:
        tb = min(tb, _round_up(pl.cdiv(b_sub, num_tc), 8))
    return max(8, tb)


# -----------------------------------------------------------------------------
# Jitted apply: returns the batch-padded, lane-padded bf16 output
# -----------------------------------------------------------------------------
@jax.jit
def qnetwork_apply_padded(x, w1, b1, w2, b2, w3, b3):
    """Fused MLP.  x: (B, S) f32.  Returns (round_up(B, TB), lane) bf16.
    Padding-aware consumers (e.g. argmax over the first A lanes) should use
    this directly to avoid a second HBM pass over the output."""
    B, S = x.shape
    lane = w3.shape[1]

    TB = _tile_rows(B, S, lane)
    Bp = _round_up(B, TB)
    if Bp != B:
        x = jnp.pad(x, ((0, Bp - B), (0, 0)))

    resident = lambda shape: pl.BlockSpec(shape, lambda i: (0,) * len(shape))

    flops = 2 * Bp * (S * HIDDEN + HIDDEN * HIDDEN + HIDDEN * lane)
    bytes_accessed = (Bp * S * 4 + Bp * lane * 2
                      + (w1.size + w2.size + w3.size) * 2
                      + (b1.size + b2.size + b3.size) * 4)

    return pl.pallas_call(
        qnetwork_kernel,
        out_shape=jax.ShapeDtypeStruct((Bp, lane), jnp.bfloat16),
        grid=(Bp // TB,),
        in_specs=[
            pl.BlockSpec((TB, S), lambda i: (i, 0)),   # x: tiled over batch
            resident(w1.shape), resident(b1.shape),    # weights/biases stay
            resident(w2.shape), resident(b2.shape),    # VMEM-resident
            resident(w3.shape), resident(b3.shape),    # (constant index_map)
        ],
        out_specs=pl.BlockSpec((TB, lane), lambda i: (i, 0)),
        compiler_params=pltpu.CompilerParams(
            dimension_semantics=("parallel",)),        # 2-TC shard on v7x
        cost_estimate=pl.CostEstimate(
            flops=flops, transcendentals=0, bytes_accessed=bytes_accessed),
    )(x, w1, b1, w2, b2, w3, b3)


# -----------------------------------------------------------------------------
# Convenience wrapper matching the PyTorch module's (B, action_size) output
# -----------------------------------------------------------------------------
def qnetwork_forward(x, params, prepared=None):
    """state -> action values, (B, A) f32.  Pass `prepared=prepare_params(...)`
    to keep per-call parameter prep off the hot path.  Note: the final slice /
    f32 cast is an extra pass over the output; latency-critical callers should
    consume qnetwork_apply_padded's padded bf16 result directly."""
    if prepared is None:
        prepared = prepare_params(params)
    A = params["w3"].shape[1]
    out_padded = qnetwork_apded = qnetwork_apply_padded(
        x, prepared["w1"], prepared["b1"], prepared["w2"], prepared["b2"],
        prepared["w3"], prepared["b3"]) if False else qnetwork_apply_padded(
        x, prepared["w1"], prepared["b1"], prepared["w2"], prepared["b2"],
        prepared["w3"], prepared["b3"])
    return out_padded[:x.shape[0], :A].astype(jnp.float32)


# -----------------------------------------------------------------------------
# Init + pure-JAX reference
# -----------------------------------------------------------------------------
def init_params(key, state_size, action_size, hidden=HIDDEN):
    """Deterministic init mimicking torch.nn.Linear default:
    U(-1/sqrt(fan_in), 1/sqrt(fan_in)) for both weight and bias.
    Weights stored as (in, out) so forward is x @ W."""
    def linear(k, fan_in, fan_out):
        kw, kb = jax.random.split(k)
        bound = 1.0 / jnp.sqrt(jnp.float32(fan_in))
        w = jax.random.uniform(kw, (fan_in, fan_out), jnp.float32,
                               minval=-bound, maxval=bound)
        b = jax.random.uniform(kb, (1, fan_out), jnp.float32,
                               minval=-bound, maxval=bound)
        return w, b

    k1, k2, k3 = jax.random.split(key, 3)
    w1, b1 = linear(k1, state_size, hidden)
    w2, b2 = linear(k2, hidden, hidden)
    w3, b3 = linear(k3, hidden, action_size)
    return {"w1": w1, "b1": b1, "w2": w2, "b2": b2, "w3": w3, "b3": b3}


def reference_forward(x, params):
    """Plain-JAX f32 reference of the same forward pass."""
    h1 = jnp.maximum(x @ params["w1"] + params["b1"], 0.0)
    h2 = jnp.maximum(h1 @ params["w2"] + params["b2"], 0.0)
    return h2 @ params["w3"] + params["b3"]


if __name__ == "__main__":
    key = jax.random.PRNGKey(0)
    k_params, k_x = jax.random.split(key)

    state_size = 8
    action_size = 4
    batch = 8

    params = init_params(k_params, state_size, action_size)
    prepared = prepare_params(params)          # one-time prep, reused per call

    x = jax.random.normal(k_x, (batch, state_size), jnp.float32)

    out = qnetwork_forward(x, params, prepared=prepared)
    out = jax.block_until_ready(out)

    ref = reference_forward(x, params)
    assert out.shape == (batch, action_size)
    # bf16 matmul inputs + bf16 output store, f32 accumulation -> small,
    # bounded deviation from the pure-f32 reference at this input scale.
    assert jnp.allclose(out, ref, atol=2e-2, rtol=2e-2), "mismatch vs reference"

    print("KERNEL_OK")
</pallas_src>

<mosaic_0001>
module attributes {stable_mosaic.version = 11 : i64} {
  func.func @qnetwork_kernel(%arg0: i32, %arg1: memref<8x8xf32, #tpu.memory_space<vmem>>, %arg2: memref<8x128xbf16, #tpu.memory_space<vmem>>, %arg3: memref<1x128xf32, #tpu.memory_space<vmem>>, %arg4: memref<128x128xbf16, #tpu.memory_space<vmem>>, %arg5: memref<1x128xf32, #tpu.memory_space<vmem>>, %arg6: memref<128x128xbf16, #tpu.memory_space<vmem>>, %arg7: memref<1x128xf32, #tpu.memory_space<vmem>>, %arg8: memref<8x128xbf16, #tpu.memory_space<vmem>>) attributes {dimension_semantics = [#tpu.dimension_semantics<parallel>], iteration_bounds = array<i64: 1>, scalar_prefetch = 0 : i64, scratch_operands = 0 : i64, tpu.core_type = #tpu.core_type<tc>, window_params = [{transform_indices = @transform_0, window_bounds = array<i64: 8, 8>}, {pipeline_mode = #tpu.pipeline_mode<synchronous>, transform_indices = @transform_1, window_bounds = array<i64: 8, 128>}, {pipeline_mode = #tpu.pipeline_mode<synchronous>, transform_indices = @transform_2, window_bounds = array<i64: 1, 128>}, {pipeline_mode = #tpu.pipeline_mode<synchronous>, transform_indices = @transform_3, window_bounds = array<i64: 128, 128>}, {pipeline_mode = #tpu.pipeline_mode<synchronous>, transform_indices = @transform_4, window_bounds = array<i64: 1, 128>}, {pipeline_mode = #tpu.pipeline_mode<synchronous>, transform_indices = @transform_5, window_bounds = array<i64: 128, 128>}, {pipeline_mode = #tpu.pipeline_mode<synchronous>, transform_indices = @transform_6, window_bounds = array<i64: 1, 128>}, {transform_indices = @transform_7, window_bounds = array<i64: 8, 128>}]} {
    %c0 = arith.constant 0 : index
    %c0_0 = arith.constant 0 : index
    %0 = vector.load %arg1[%c0, %c0_0] : memref<8x8xf32, #tpu.memory_space<vmem>>, vector<8x8xf32>
    %1 = arith.truncf %0 : vector<8x8xf32> to vector<8x8xbf16>
    %c0_1 = arith.constant 0 : index
    %c0_2 = arith.constant 0 : index
    %2 = vector.load %arg2[%c0_1, %c0_2] : memref<8x128xbf16, #tpu.memory_space<vmem>>, vector<8x128xbf16>
    %cst = arith.constant dense<0.000000e+00> : vector<8x128xf32>
    %3 = tpu.matmul %1, %2, %cst {dimension_numbers = #tpu.dot_dimension_numbers<[1], [0], [0], [1], [0, 0, 1, 1], [], []>} : vector<8x8xbf16>, vector<8x128xbf16>, vector<8x128xf32> -> vector<8x128xf32>
    %c0_3 = arith.constant 0 : index
    %c0_4 = arith.constant 0 : index
    %4 = vector.load %arg3[%c0_3, %c0_4] : memref<1x128xf32, #tpu.memory_space<vmem>>, vector<1x128xf32>
    %5 = vector.broadcast %4 : vector<1x128xf32> to vector<8x128xf32>
    %6 = arith.addf %3, %5 : vector<8x128xf32>
    %cst_5 = arith.constant 0.000000e+00 : f32
    %7 = vector.broadcast %cst_5 : f32 to vector<8x128xf32>
    %8 = arith.maximumf %6, %7 : vector<8x128xf32>
    %9 = arith.truncf %8 : vector<8x128xf32> to vector<8x128xbf16>
    %c0_6 = arith.constant 0 : index
    %c0_7 = arith.constant 0 : index
    %10 = vector.load %arg4[%c0_6, %c0_7] : memref<128x128xbf16, #tpu.memory_space<vmem>>, vector<128x128xbf16>
    %cst_8 = arith.constant dense<0.000000e+00> : vector<8x128xf32>
    %11 = tpu.matmul %9, %10, %cst_8 {dimension_numbers = #tpu.dot_dimension_numbers<[1], [0], [0], [1], [0, 0, 1, 1], [], []>} : vector<8x128xbf16>, vector<128x128xbf16>, vector<8x128xf32> -> vector<8x128xf32>
    %c0_9 = arith.constant 0 : index
    %c0_10 = arith.constant 0 : index
    %12 = vector.load %arg5[%c0_9, %c0_10] : memref<1x128xf32, #tpu.memory_space<vmem>>, vector<1x128xf32>
    %13 = vector.broadcast %12 : vector<1x128xf32> to vector<8x128xf32>
    %14 = arith.addf %11, %13 : vector<8x128xf32>
    %cst_11 = arith.constant 0.000000e+00 : f32
    %15 = vector.broadcast %cst_11 : f32 to vector<8x128xf32>
    %16 = arith.maximumf %14, %15 : vector<8x128xf32>
    %17 = arith.truncf %16 : vector<8x128xf32> to vector<8x128xbf16>
    %c0_12 = arith.constant 0 : index
    %c0_13 = arith.constant 0 : index
    %18 = vector.load %arg6[%c0_12, %c0_13] : memref<128x128xbf16, #tpu.memory_space<vmem>>, vector<128x128xbf16>
    %cst_14 = arith.constant dense<0.000000e+00> : vector<8x128xf32>
    %19 = tpu.matmul %17, %18, %cst_14 {dimension_numbers = #tpu.dot_dimension_numbers<[1], [0], [0], [1], [0, 0, 1, 1], [], []>} : vector<8x128xbf16>, vector<128x128xbf16>, vector<8x128xf32> -> vector<8x128xf32>
    %c0_15 = arith.constant 0 : index
    %c0_16 = arith.constant 0 : index
    %20 = vector.load %arg7[%c0_15, %c0_16] : memref<1x128xf32, #tpu.memory_space<vmem>>, vector<1x128xf32>
    %21 = vector.broadcast %20 : vector<1x128xf32> to vector<8x128xf32>
    %22 = arith.addf %19, %21 : vector<8x128xf32>
    %23 = arith.truncf %22 : vector<8x128xf32> to vector<8x128xbf16>
    %c0_17 = arith.constant 0 : index
    %c0_18 = arith.constant 0 : index
    %24 = vector.load %arg8[%c0_17, %c0_18] : memref<8x128xbf16, #tpu.memory_space<vmem>>, vector<8x128xbf16>
    tpu.vector_store %arg8[%c0_17, %c0_18], %23 {strides = array<i32>} : memref<8x128xbf16, #tpu.memory_space<vmem>>, vector<8x128xbf16>,
    return
  }
  func.func @transform_0(%arg0: i32) -> (i32, i32) {
    %c0_i32 = arith.constant 0 : i32
    %c0_i32_0 = arith.constant 0 : i32
    return %arg0, %c0_i32 : i32, i32
  }
  func.func @transform_1(%arg0: i32) -> (i32, i32) {
    %c0_i32 = arith.constant 0 : i32
    %c0_i32_0 = arith.constant 0 : i32
    %c0_i32_1 = arith.constant 0 : i32
    return %c0_i32, %c0_i32_0 : i32, i32
  }
  func.func @transform_2(%arg0: i32) -> (i32, i32) {
    %c0_i32 = arith.constant 0 : i32
    %c0_i32_0 = arith.constant 0 : i32
    %c0_i32_1 = arith.constant 0 : i32
    return %c0_i32, %c0_i32_0 : i32, i32
  }
  func.func @transform_3(%arg0: i32) -> (i32, i32) {
    %c0_i32 = arith.constant 0 : i32
    %c0_i32_0 = arith.constant 0 : i32
    %c0_i32_1 = arith.constant 0 : i32
    return %c0_i32, %c0_i32_0 : i32, i32
  }
  func.func @transform_4(%arg0: i32) -> (i32, i32) {
    %c0_i32 = arith.constant 0 : i32
    %c0_i32_0 = arith.constant 0 : i32
    %c0_i32_1 = arith.constant 0 : i32
    return %c0_i32, %c0_i32_0 : i32, i32
  }
  func.func @transform_5(%arg0: i32) -> (i32, i32) {
    %c0_i32 = arith.constant 0 : i32
    %c0_i32_0 = arith.constant 0 : i32
    %c0_i32_1 = arith.constant 0 : i32
    return %c0_i32, %c0_i32_0 : i32, i32
  }
  func.func @transform_6(%arg0: i32) -> (i32, i32) {
    %c0_i32 = arith.constant 0 : i32
    %c0_i32_0 = arith.constant 0 : i32
    %c0_i32_1 = arith.constant 0 : i32
    return %c0_i32, %c0_i32_0 : i32, i32
  }
  func.func @transform_7(%arg0: i32) -> (i32, i32) {
    %c0_i32 = arith.constant 0 : i32
    %c0_i32_0 = arith.constant 0 : i32
    return %arg0, %c0_i32 : i32, i32
  }
}

</mosaic_0001>

<llo_original>
// kernel: qnetwork_apply_padded.1
$region0: #{qnetwork_apply_padded.1}
  #allocation0 [shape = 'u32[]', space=smem, size = 0x4, offset = 0x4, fixed_abs, tag = 'smem constant byte address 0x4 - core index']
  #allocation1 [shape = 'u32[72,128]{1,0:T(1,128)}', space=vmem, size = 0x9000, scoped, tag = 'internal scratch']
  %s0 = inlined_call_operand.hbm [shape: f32[8,8], index: 0, kind: input, shape index: {}]
  %s1 = inlined_call_operand.hbm [shape: bf16[8,128], index: 1, kind: input, shape index: {}]
  %s2 = inlined_call_operand.vmem [shape: f32[1,128], index: 2, kind: input, shape index: {}]
  %s3 = inlined_call_operand.hbm [shape: bf16[128,128], index: 3, kind: input, shape index: {}]
  %s4 = inlined_call_operand.vmem [shape: f32[1,128], index: 4, kind: input, shape index: {}]
  %s5 = inlined_call_operand.hbm [shape: bf16[128,128], index: 5, kind: input, shape index: {}]
  %s6 = inlined_call_operand.vmem [shape: f32[1,128], index: 6, kind: input, shape index: {}]
  %s7 = inlined_call_operand.hbm [shape: bf16[8,128], index: 7, kind: output, shape index: {}]
  %s8 = sld [smem:[#allocation0]]
  $region54: #{qnetwork_apply_padded.1} parent=0
    _
  %s10 = ssub.s32 1, %s8
  %s11 = scalar_select 0, %s10, %s8
  $region1: #{qnetwork_apply_padded.1} parent=0
    #allocation2 [shape = 'u8[4096]{0}', space=vmem, size = 0x1000, scoped, tag = 'input window, operand 0, single buffered']
    #allocation3 [shape = 's32[1]{0}', space=sflag, size = 0x4, scoped, tag = 'scoped memory for qnetwork_apply_padded.1']
    #allocation4 [shape = 's32[1]{0}', space=sflag, size = 0x4, scoped, tag = 'scoped memory for qnetwork_apply_padded.1']
    #allocation5 [shape = 'u8[2048]{0}', space=vmem, size = 0x800, scoped, tag = 'input window, operand 1, single buffered']
    #allocation6 [shape = 's32[1]{0}', space=sflag, size = 0x4, scoped, tag = 'scoped memory for qnetwork_apply_padded.1']
    #allocation7 [shape = 'u8[32768]{0}', space=vmem, size = 0x8000, scoped, tag = 'input window, operand 3, single buffered']
    #allocation8 [shape = 'u8[32768]{0}', space=vmem, size = 0x8000, scoped, tag = 'input window, operand 5, single buffered']
    #allocation9 [shape = 's32[1]{0}', space=sflag, size = 0x4, scoped, tag = 'scoped memory for qnetwork_apply_padded.1']
    #allocation10 [shape = 'u8[2048]{0}', space=vmem, size = 0x800, scoped, tag = 'output window, operand 0, single buffered']
    %12 = vsyncpa [#allocation3], 0
    %13 = vsyncpa [#allocation6], 0
    %14 = vsyncpa [#allocation9], 0
    %15 = vsyncpa [#allocation4], 0
    // Predicated region
    $region2: #{qnetwork_apply_padded.1} parent=1 // pred_check
      _
    $region3: #{qnetwork_apply_padded.1} parent=1 // pred_check_branch
      %17 = sbr.rel (0) target = $region5
    $region4: #{qnetwork_apply_padded.1} parent=1 // pred_region
      %19 = vsyncadd [#allocation3], 0
      %s21 = sshll.u32 %s0, 4
      %s22 = int_to_ptr.hbm [resolvable:$true] %s21
      %s23 = sshll.u32 [#allocation2], 4
      %s24 = int_to_ptr.vmem [resolvable:$true] %s23
      %26 = dma.hbm_to_vmem [thread:$0]  %s22, 128, %s24, [#allocation3]
    $region5: #{qnetwork_apply_padded.1} parent=1 // pred_fallthru
      _
    // Predicated region
    $region6: #{qnetwork_apply_padded.1} parent=1 // pred_check
      _
    $region7: #{qnetwork_apply_padded.1} parent=1 // pred_check_branch
      %28 = sbr.rel (0) target = $region9
    $region8: #{qnetwork_apply_padded.1} parent=1 // pred_region
      %30 = vsyncadd [#allocation6], 0
      %s32 = sshll.u32 %s1, 4
      %s33 = int_to_ptr.hbm [resolvable:$true] %s32
      %s34 = sshll.u32 [#allocation5], 4
      %s35 = int_to_ptr.vmem [resolvable:$true] %s34
      %37 = dma.hbm_to_vmem [thread:$0]  %s33, 64, %s35, [#allocation6]
    $region9: #{qnetwork_apply_padded.1} parent=1 // pred_fallthru
      _
    // Predicated region
    $region10: #{qnetwork_apply_padded.1} parent=1 // pred_check
      _
    $region11: #{qnetwork_apply_padded.1} parent=1 // pred_check_branch
      %39 = sbr.rel (0) target = $region13
    $region12: #{qnetwork_apply_padded.1} parent=1 // pred_region
      _
    $region13: #{qnetwork_apply_padded.1} parent=1 // pred_fallthru
      _
    // Predicated region
    $region14: #{qnetwork_apply_padded.1} parent=1 // pred_check
      _
    $region15: #{qnetwork_apply_padded.1} parent=1 // pred_check_branch
      %41 = sbr.rel (0) target = $region17
    $region16: #{qnetwork_apply_padded.1} parent=1 // pred_region
      %43 = vsyncadd [#allocation6], 0
      %s44 = sshll.u32 %s3, 4
      %s45 = int_to_ptr.hbm [resolvable:$true] %s44
      %s46 = sshll.u32 [#allocation7], 4
      %s47 = int_to_ptr.vmem [resolvable:$true] %s46
      %52 = dma.hbm_to_vmem [thread:$0]  %s45, 1024, %s47, [#allocation6], 64, 64, 4
    $region17: #{qnetwork_apply_padded.1} parent=1 // pred_fallthru
      _
    // Predicated region
    $region18: #{qnetwork_apply_padded.1} parent=1 // pred_check
      _
    $region19: #{qnetwork_apply_padded.1} parent=1 // pred_check_branch
      %54 = sbr.rel (0) target = $region21
    $region20: #{qnetwork_apply_padded.1} parent=1 // pred_region
      _
    $region21: #{qnetwork_apply_padded.1} parent=1 // pred_fallthru
      _
    // Predicated region
    $region22: #{qnetwork_apply_padded.1} parent=1 // pred_check
      _
    $region23: #{qnetwork_apply_padded.1} parent=1 // pred_check_branch
      %56 = sbr.rel (0) target = $region25
    $region24: #{qnetwork_apply_padded.1} parent=1 // pred_region
      %58 = vsyncadd [#allocation9], 0
      %s59 = sshll.u32 %s5, 4
      %s60 = int_to_ptr.hbm [resolvable:$true] %s59
      %s61 = sshll.u32 [#allocation8], 4
      %s62 = int_to_ptr.vmem [resolvable:$true] %s61
      %67 = dma.hbm_to_vmem [thread:$0]  %s60, 1024, %s62, [#allocation9], 64, 64, 4
    $region25: #{qnetwork_apply_padded.1} parent=1 // pred_fallthru
      _
    // Predicated region
    $region26: #{qnetwork_apply_padded.1} parent=1 // pred_check
      _
    $region27: #{qnetwork_apply_padded.1} parent=1 // pred_check_branch
      %69 = sbr.rel (0) target = $region29
    $region28: #{qnetwork_apply_padded.1} parent=1 // pred_region
      _
    $region29: #{qnetwork_apply_padded.1} parent=1 // pred_fallthru
      _
    // Predicated region
    $region30: #{qnetwork_apply_padded.1} parent=1 // pred_check
      _
    $region31: #{qnetwork_apply_padded.1} parent=1 // pred_check_branch
      %71 = sbr.rel (0) target = $region33
    $region32: #{qnetwork_apply_padded.1} parent=1 // pred_region
      %73 = dma.done [#allocation3], 128
    $region33: #{qnetwork_apply_padded.1} parent=1 // pred_fallthru
      _
    // Predicated region
    $region34: #{qnetwork_apply_padded.1} parent=1 // pred_check
      _
    $region35: #{qnetwork_apply_padded.1} parent=1 // pred_check_branch
      %75 = sbr.rel (0) target = $region37
    $region36: #{qnetwork_apply_padded.1} parent=1 // pred_region
      %77 = dma.done [#allocation6], 64
    $region37: #{qnetwork_apply_padded.1} parent=1 // pred_fallthru
      _
    // Predicated region
    $region38: #{qnetwork_apply_padded.1} parent=1 // pred_check
      _
    $region39: #{qnetwork_apply_padded.1} parent=1 // pred_check_branch
      %79 = sbr.rel (0) target = $region41
    $region40: #{qnetwork_apply_padded.1} parent=1 // pred_region
      %81 = dma.done [#allocation6], 1024
    $region41: #{qnetwork_apply_padded.1} parent=1 // pred_fallthru
      _
    // Predicated region
    $region42: #{qnetwork_apply_padded.1} parent=1 // pred_check
      _
    $region43: #{qnetwork_apply_padded.1} parent=1 // pred_check_branch
      %83 = sbr.rel (0) target = $region45
    $region44: #{qnetwork_apply_padded.1} parent=1 // pred_region
      %85 = dma.done [#allocation9], 1024
    $region45: #{qnetwork_apply_padded.1} parent=1 // pred_fallthru
      _
    %v87 = vld [vmem:[#allocation2] sm:$0xff]
    %v88 = vpack.c.bf16 %v87, %v87
    %v89 = vld [vmem:[#allocation5] sm:$0xf]
    %v90 = vld [vmem:[%s2] sm:$0x1]
    %v92 = vperm.slane %v90, 0
    %vm94 = vcmask 64512
    %v96 = vsel %vm94, %v88, 0
    %vm98 = vcmask 1043456
    %v100 = vsel %vm98, %v89, 0
    %102 = vmatpush.bf16.msra.mxu0 0
    %103 = vmatpush.bf16.msra.mxu0 0
    %104 = vmatpush.bf16.msra.mxu0 0
    %105 = vmatpush.bf16.msra.mxu0 0
    %106 = vmatpush.bf16.msra.mxu0 0
    %107 = vmatpush.bf16.msra.mxu0 0
    %108 = vmatpush.bf16.msra.mxu0 0
    %109 = vmatpush.bf16.msra.mxu0 %v100
    %110 = vmatmul.bf16.gmra.mxu0 %v96
    %v111 = vpop.f32.mrf.mxu0
    %v112 = vadd.f32 %v92, %v111
    %v113 = vpop.f32.mrf.mxu0
    %114 = vdwg.mxu0
    %v115 = vmax.f32 %v112, 0.0
    %v116 = vpack.c.bf16 %v115, %v115
    %v117 = vld [vmem:[#allocation7] sm:$0xf]
    %v118 = vld [vmem:[#allocation7 + $0x4] sm:$0xf]
    %v119 = vld [vmem:[#allocation7 + $0x8] sm:$0xf]
    %v120 = vld [vmem:[#allocation7 + $0xc] sm:$0xf]
    %v121 = vld [vmem:[#allocation7 + $0x10] sm:$0xf]
    %v122 = vld [vmem:[#allocation7 + $0x14] sm:$0xf]
    %v123 = vld [vmem:[#allocation7 + $0x18] sm:$0xf]
    %v124 = vld [vmem:[#allocation7 + $0x1c] sm:$0xf]
    %v125 = vld [vmem:[#allocation7 + $0x20] sm:$0xf]
    %v126 = vld [vmem:[#allocation7 + $0x24] sm:$0xf]
    %v127 = vld [vmem:[#allocation7 + $0x28] sm:$0xf]
    %v128 = vld [vmem:[#allocation7 + $0x2c] sm:$0xf]
    %v129 = vld [vmem:[#allocation7 + $0x30] sm:$0xf]
    %v130 = vld [vmem:[#allocation7 + $0x34] sm:$0xf]
    %v131 = vld [vmem:[#allocation7 + $0x38] sm:$0xf]
    %v132 = vld [vmem:[#allocation7 + $0x3c] sm:$0xf]
    %v133 = vld [vmem:[%s4] sm:$0x1]
    %v135 = vperm.slane %v133, 0
    %v153 = vunpack.c.l.b16 %v117
    %v154 = vunpack.c.l.b16 %v118
    %v155 = vunpack.c.l.b16 %v119
    %v156 = vunpack.c.l.b16 %v120
    %v157 = vunpack.c.l.b16 %v121
    %v158 = vunpack.c.l.b16 %v122
    %v159 = vunpack.c.l.b16 %v123
    %v160 = vunpack.c.l.b16 %v124
    %v161 = vunpack.c.l.b16 %v125
    %v162 = vunpack.c.l.b16 %v126
    %v163 = vunpack.c.l.b16 %v127
    %v164 = vunpack.c.l.b16 %v128
    %v165 = vunpack.c.l.b16 %v129
    %v166 = vunpack.c.l.b16 %v130
    %v167 = vunpack.c.l.b16 %v131
    %v168 = vunpack.c.l.b16 %v132
    %v169 = vpack.c.b16 %v154, %v153
    %v170 = vpack.c.b16 %v156, %v155
    %v171 = vpack.c.b16 %v158, %v157
    %v172 = vpack.c.b16 %v160, %v159
    %v173 = vpack.c.b16 %v162, %v161
    %v174 = vpack.c.b16 %v164, %v163
    %v175 = vpack.c.b16 %v166, %v165
    %v176 = vpack.c.b16 %v168, %v167
    %185 = vmatpush.bf16.msra.mxu0 %v176
    %186 = vmatpush.bf16.msra.mxu0 %v175
    %187 = vmatpush.bf16.msra.mxu0 %v174
    %188 = vmatpush.bf16.msra.mxu0 %v173
    %189 = vmatpush.bf16.msra.mxu0 %v172
    %190 = vmatpush.bf16.msra.mxu0 %v171
    %191 = vmatpush.bf16.msra.mxu0 %v170
    %192 = vmatpush.bf16.msra.mxu0 %v169
    %193 = vmatmul.bf16.gmra.mxu0 %v116
    %v194 = vpop.f32.mrf.mxu0
    %v195 = vadd.f32 %v135, %v194
    %v196 = vpop.f32.mrf.mxu0
    %197 = vdwg.mxu0
    %v198 = vmax.f32 %v195, 0.0
    %v199 = vpack.c.bf16 %v198, %v198
    %v200 = vld [vmem:[#allocation8] sm:$0xf]
    %v201 = vld [vmem:[#allocation8 + $0x4] sm:$0xf]
    %v202 = vld [vmem:[#allocation8 + $0x8] sm:$0xf]
    %v203 = vld [vmem:[#allocation8 + $0xc] sm:$0xf]
    %v204 = vld [vmem:[#allocation8 + $0x10] sm:$0xf]
    %v205 = vld [vmem:[#allocation8 + $0x14] sm:$0xf]
    %v206 = vld [vmem:[#allocation8 + $0x18] sm:$0xf]
    %v207 = vld [vmem:[#allocation8 + $0x1c] sm:$0xf]
    %v208 = vld [vmem:[#allocation8 + $0x20] sm:$0xf]
    %v209 = vld [vmem:[#allocation8 + $0x24] sm:$0xf]
    %v210 = vld [vmem:[#allocation8 + $0x28] sm:$0xf]
    %v211 = vld [vmem:[#allocation8 + $0x2c] sm:$0xf]
    %v212 = vld [vmem:[#allocation8 + $0x30] sm:$0xf]
    %v213 = vld [vmem:[#allocation8 + $0x34] sm:$0xf]
    %v214 = vld [vmem:[#allocation8 + $0x38] sm:$0xf]
    %v215 = vld [vmem:[#allocation8 + $0x3c] sm:$0xf]
    %v216 = vld [vmem:[%s6] sm:$0x1]
    %v218 = vperm.slane %v216, 0
    %v236 = vunpack.c.l.b16 %v200
    %v237 = vunpack.c.l.b16 %v201
    %v238 = vunpack.c.l.b16 %v202
    %v239 = vunpack.c.l.b16 %v203
    %v240 = vunpack.c.l.b16 %v204
    %v241 = vunpack.c.l.b16 %v205
    %v242 = vunpack.c.l.b16 %v206
    %v243 = vunpack.c.l.b16 %v207
    %v244 = vunpack.c.l.b16 %v208
    %v245 = vunpack.c.l.b16 %v209
    %v246 = vunpack.c.l.b16 %v210
    %v247 = vunpack.c.l.b16 %v211
    %v248 = vunpack.c.l.b16 %v212
    %v249 = vunpack.c.l.b16 %v213
    %v250 = vunpack.c.l.b16 %v214
    %v251 = vunpack.c.l.b16 %v215
    %v252 = vpack.c.b16 %v237, %v236
    %v253 = vpack.c.b16 %v239, %v238
    %v254 = vpack.c.b16 %v241, %v240
    %v255 = vpack.c.b16 %v243, %v242
    %v256 = vpack.c.b16 %v245, %v244
    %v257 = vpack.c.b16 %v247, %v246
    %v258 = vpack.c.b16 %v249, %v248
    %v259 = vpack.c.b16 %v251, %v250
    %268 = vmatpush.bf16.msra.mxu0 %v259
    %269 = vmatpush.bf16.msra.mxu0 %v258
    %270 = vmatpush.bf16.msra.mxu0 %v257
    %271 = vmatpush.bf16.msra.mxu0 %v256
    %272 = vmatpush.bf16.msra.mxu0 %v255
    %273 = vmatpush.bf16.msra.mxu0 %v254
    %274 = vmatpush.bf16.msra.mxu0 %v253
    %275 = vmatpush.bf16.msra.mxu0 %v252
    %276 = vmatmul.bf16.gmra.mxu0 %v199
    %v277 = vpop.f32.mrf.mxu0
    %v278 = vadd.f32 %v218, %v277
    %v279 = vpop.f32.mrf.mxu0
    %280 = vdwg.mxu0
    %v281 = vpack.c.bf16 %v278, %v278
    %282 = vst [vmem:[#allocation10] sm:$0xf] %v281
    // Predicated region
    $region46: #{qnetwork_apply_padded.1} parent=1 // pred_check
      _
    $region47: #{qnetwork_apply_padded.1} parent=1 // pred_check_branch
      %284 = sbr.rel (0) target = $region49
    $region48: #{qnetwork_apply_padded.1} parent=1 // pred_region
      %286 = vsyncadd [#allocation4], 0
      %s288 = sshll.u32 [#allocation10], 4
      %s289 = int_to_ptr.vmem [resolvable:$true] %s288
      %s290 = sshll.u32 %s7, 4
      %s291 = int_to_ptr.hbm [resolvable:$true] %s290
      %293 = dma.vmem_to_hbm [thread:$0]  %s289, 64, %s291, [#allocation4]
    $region49: #{qnetwork_apply_padded.1} parent=1 // pred_fallthru
      _
    // Predicated region
    $region50: #{qnetwork_apply_padded.1} parent=1 // pred_check
      _
    $region51: #{qnetwork_apply_padded.1} parent=1 // pred_check_branch
      %295 = sbr.rel (0) target = $region53
    $region52: #{qnetwork_apply_padded.1} parent=1 // pred_region
      %297 = dma.done [#allocation4], 64
    $region53: #{qnetwork_apply_padded.1} parent=1 // pred_fallthru
      _
    %298 = vsyncpa [#allocation3], 1
    %299 = vsyncpa [#allocation6], 1
    %300 = vsyncpa [#allocation9], 1
    %301 = vsyncpa [#allocation4], 1

</llo_original>
